<compile_context>
chip_gen: v7x
topology: tpu7x:2x2x1
jax: 0.10.0
libtpu: 0.0.40
codegen_flags: <defaults>
</compile_context>

<pallas_src>
import functools

import jax
import jax.numpy as jnp
import numpy as np
from jax import lax
from jax.experimental import pallas as pl
from jax.experimental.pallas import tpu as pltpu

_VMEM_LIMIT_BYTES = 64 * 1024 * 1024   # explicit scoped-VMEM budget (<= v7x physical 64 MiB)


def _cparams(dims):
    return pltpu.CompilerParams(dimension_semantics=dims,
                                vmem_limit_bytes=_VMEM_LIMIT_BYTES)


# ------------------------------ tiling helpers ------------------------------

def _pick_row_tile(m, cap=512):
    """Largest row tile <= cap that is a multiple of 8 and divides m; else the full m."""
    if m <= cap:
        return m
    t = (cap // 8) * 8
    while t >= 8:
        if m % t == 0:
            return t
        t -= 8
    return m


def _pick_col_tile(n, cap=512):
    """Lane-dim tile: a 128-multiple divisor of n (<= cap) or the full n."""
    if n % 128 != 0:
        return n
    t = min(cap, n)
    t = (t // 128) * 128
    while t > 128:
        if n % t == 0:
            return t
        t -= 128
    return 128


def _pick_k_tile(k, cap=512):
    """Contraction tile for the fc kernel: a 128-multiple divisor of k (<= cap) or full k."""
    if k % 128 != 0:
        return k
    t = min(cap, k)
    t = (t // 128) * 128
    while t > 128:
        if k % t == 0:
            return t
        t -= 128
    return 128


def _pick_chunk(n, cap=8):
    """Head-batch slices per attention grid step; keep >=2 grid steps so v7x's 2 TCs work."""
    if n <= 1:
        return max(n, 1)
    cap = min(cap, max(1, n // 2))
    for c in range(cap, 0, -1):
        if n % c == 0:
            return c
    return 1


def _pick_seq_tile(lq, lk, bb, cap=512, budget_bytes=4 << 20):
    """Lq tile; must be a 128-multiple (lane-dense ctx output) or the full Lq."""
    if lq % 128 != 0:
        return lq
    t = min(cap, lq)
    t = (t // 128) * 128
    while t > 128:
        if lq % t == 0 and bb * t * lk * 4 <= budget_bytes:
            return t
        t -= 128
    return 128


def _pick_channel_tile(d_v):
    """d_v-channel chunk for the sparse-score kernel (8-aligned to satisfy block rules)."""
    return 8 if (d_v % 8 == 0 and d_v > 8) else d_v


# ------------------------------ Pallas kernels ------------------------------

def _linear_kernel(x_ref, w_ref, b_ref, o_ref):
    # y = x @ W + b  (bf16 MXU operands, f32 accumulate)
    xb = x_ref[...].astype(jnp.bfloat16)
    wb = w_ref[...].astype(jnp.bfloat16)
    y = jnp.dot(xb, wb, preferred_element_type=jnp.float32) + b_ref[...]
    o_ref[...] = y.astype(o_ref.dtype)


def _sparse_score_kernel(vt_ref, score_ref):
    # vt block: (dc, n, L) channel chunk of the channel-major head-split origin_v.
    # Per channel c: score[c, a] = t / (t * nn_sim[a]) = 1 / nn_sim[a]  (see module TODO).
    vb = vt_ref[...].astype(jnp.bfloat16)                # MXU operand
    v32 = vb.astype(jnp.float32)
    dc, n, L = v32.shape
    # Gram-matrix distance: dist^2(a,b) = |a|^2 + |b|^2 - 2 a.b   (MXU, not O(n^2 L) VPU)
    sq = jnp.sum(v32 * v32, axis=2)                      # (dc, n)
    gram = jnp.einsum('cal,cbl->cab', vb, vb,
                      preferred_element_type=jnp.float32)            # (dc, n, n)
    d2 = sq[:, :, None] + sq[:, None, :] - 2.0 * gram
    dist = jnp.sqrt(jnp.maximum(d2, 0.0))
    sim = 1.0 / (1.0 + dist)                             # similarity(x, y)
    # deterministic candidate support {0, ..., n-2} of np.random.randint(0, n-1)
    col = lax.broadcasted_iota(jnp.int32, (n, n), 1)
    nn_sim = jnp.max(jnp.where(col[None] < (n - 1), sim, 0.0), axis=2)   # (dc, n)
    safe = jnp.where(nn_sim > 0.0, nn_sim, 1.0)
    score_ref[...] = jnp.where(nn_sim > 0.0, 1.0 / safe, 0.0).astype(score_ref.dtype)


def _attention_kernel(q_ref, k_ref, score_ref, attn_ref, ctx_ref, *, inv_temperature):
    # One grid step = bb (head, batch) slices x one Lq tile.
    q = q_ref[...].astype(jnp.float32) * inv_temperature            # (bb, tq, d_k)
    s = jnp.einsum('bqd,bkd->bqk',
                   q.astype(jnp.bfloat16), k_ref[...].astype(jnp.bfloat16),
                   preferred_element_type=jnp.float32)              # (bb, tq, Lk)
    # softmax (dim=2) kept in f32; exact reciprocal so attention rows sum to 1.
    s = s - jnp.max(s, axis=-1, keepdims=True)
    e = jnp.exp(s)
    attn = e * pl.reciprocal(jnp.sum(e, axis=-1, keepdims=True), approx=False)
    attn_ref[...] = attn.astype(attn_ref.dtype)
    bb, tq, lk = attn.shape
    # sparse_v[a,l,c] = c3[a,l] * score[a,c]  =>  ctx[a,q,c] = score[a,c] * sum_l attn[a,q,l]*c3[a,l]
    a_idx = pl.program_id(0) * bb + lax.broadcasted_iota(jnp.int32, (bb, lk), 0)
    l_idx = lax.broadcasted_iota(jnp.int32, (bb, lk), 1)
    c3 = jnp.logical_and(a_idx >= l_idx, ((a_idx - l_idx) % 2) == 0).astype(jnp.float32)
    masked = jnp.sum(attn * c3[:, None, :], axis=-1)                # (bb, tq)
    score = score_ref[...][:, 0, :].astype(jnp.float32)             # (bb, d_v)
    # lane-dense ctx layout: (bb, d_v, tq)  (seq on the lane axis)
    ctx_ref[...] = (score[:, :, None] * masked[:, None, :]).astype(ctx_ref.dtype)


def _fc_layernorm_kernel(x_ref, w_ref, b_ref, res_ref, g_ref, beta_ref, o_ref, acc_ref, *, eps):
    # Grid: (row tiles, K tiles); K is the contraction axis (LayerNorm reduces over N, so N
    # stays whole per block and the contraction is accumulated in a VMEM f32 scratch).
    k = pl.program_id(1)

    @pl.when(k == 0)
    def _():
        acc_ref[...] = jnp.zeros_like(acc_ref)

    xb = x_ref[...].astype(jnp.bfloat16)
    wb = w_ref[...].astype(jnp.bfloat16)
    acc_ref[...] += jnp.dot(xb, wb, preferred_element_type=jnp.float32)

    @pl.when(k == pl.num_programs(1) - 1)
    def _():
        # output-dropout is identity in eval mode
        y = acc_ref[...] + b_ref[...] + res_ref[...].astype(jnp.float32)
        mu = jnp.mean(y, axis=-1, keepdims=True)
        var = jnp.mean(jnp.square(y - mu), axis=-1, keepdims=True)
        yhat = (y - mu) * lax.rsqrt(var + eps)
        o_ref[...] = (yhat * g_ref[...] + beta_ref[...]).astype(o_ref.dtype)


# -------------------------------- wrappers --------------------------------

def linear(x, w, b):
    # x: (M, K) f32, w: (K, N) bf16, b: (1, N) f32  ->  (M, N) f32
    M, K = x.shape
    N = w.shape[1]
    tm = _pick_row_tile(M)
    tn = _pick_col_tile(N)
    return pl.pallas_call(
        _linear_kernel,
        out_shape=jax.ShapeDtypeStruct((M, N), jnp.float32),
        grid=(M // tm, N // tn),
        in_specs=[
            pl.BlockSpec((tm, K), lambda i, j: (i, 0)),
            pl.BlockSpec((K, tn), lambda i, j: (0, j)),
            pl.BlockSpec((1, tn), lambda i, j: (0, j)),
        ],
        out_specs=pl.BlockSpec((tm, tn), lambda i, j: (i, j)),
        compiler_params=_cparams(("parallel", "parallel")),
    )(x, w, b)


def sparse_semi_score(vt):
    # vt: (d_v, n_bh, L) channel-major origin_v  ->  score_t: (d_v, n_bh)
    d_v, n, L = vt.shape
    dc = _pick_channel_tile(d_v)
    return pl.pallas_call(
        _sparse_score_kernel,
        out_shape=jax.ShapeDtypeStruct((d_v, n), jnp.float32),
        grid=(d_v // dc,),
        in_specs=[pl.BlockSpec((dc, n, L), lambda c: (c, 0, 0))],
        out_specs=pl.BlockSpec((dc, n), lambda c: (c, 0)),
        compiler_params=_cparams(("parallel",)),
    )(vt)


def attention(qh, kh, score, temperature, attn_dtype=jnp.float32):
    # qh: (n_bh, Lq, d_k), kh: (n_bh, Lk, d_k), score: (n_bh, 1, d_v)
    # Returns attn (n_bh, Lq, Lk) and ctx_t (n_bh, d_v, Lq).
    # NOTE: attn can be stored as bf16 (attn_dtype=jnp.bfloat16) to halve the quadratic
    # HBM write if the caller does not need full precision.
    n_bh, Lq, dk = qh.shape
    Lk = kh.shape[1]
    dv = score.shape[2]
    bb = _pick_chunk(n_bh)
    tq = _pick_seq_tile(Lq, Lk, bb)
    kern = functools.partial(_attention_kernel, inv_temperature=float(1.0 / temperature))
    attn, ctx_t = pl.pallas_call(
        kern,
        out_shape=(jax.ShapeDtypeStruct((n_bh, Lq, Lk), attn_dtype),
                   jax.ShapeDtypeStruct((n_bh, dv, Lq), jnp.float32)),
        grid=(n_bh // bb, Lq // tq),
        in_specs=[
            pl.BlockSpec((bb, tq, dk), lambda i, j: (i, j, 0)),
            pl.BlockSpec((bb, Lk, dk), lambda i, j: (i, 0, 0)),
            pl.BlockSpec((bb, 1, dv), lambda i, j: (i, 0, 0)),
        ],
        out_specs=(pl.BlockSpec((bb, tq, Lk), lambda i, j: (i, j, 0)),
                   pl.BlockSpec((bb, dv, tq), lambda i, j: (i, 0, j))),
        compiler_params=_cparams(("parallel", "parallel")),
    )(qh, kh, score)
    return attn, ctx_t


def fc_layernorm(x, w, b, residual, gamma, beta, *, eps=1e-5):
    M, K = x.shape
    N = w.shape[1]
    tm = _pick_row_tile(M)
    tk = _pick_k_tile(K)
    kern = functools.partial(_fc_layernorm_kernel, eps=eps)
    return pl.pallas_call(
        kern,
        out_shape=jax.ShapeDtypeStruct((M, N), jnp.float32),
        grid=(M // tm, K // tk),
        in_specs=[
            pl.BlockSpec((tm, tk), lambda i, k: (i, k)),
            pl.BlockSpec((tk, N), lambda i, k: (k, 0)),
            pl.BlockSpec((1, N), lambda i, k: (0, 0)),
            pl.BlockSpec((tm, N), lambda i, k: (i, 0)),
            pl.BlockSpec((1, N), lambda i, k: (0, 0)),
            pl.BlockSpec((1, N), lambda i, k: (0, 0)),
        ],
        out_specs=pl.BlockSpec((tm, N), lambda i, k: (i, 0)),
        scratch_shapes=[pltpu.VMEM((tm, N), jnp.float32)],
        compiler_params=_cparams(("parallel", "arbitrary")),
    )(x, w, b, residual, gamma, beta)


# ------------------------------ model forward ------------------------------

def init_params(key, n_head, d_model, d_k, d_v):
    ks = jax.random.split(key, 4)
    std_qk = float(np.sqrt(2.0 / (d_model + d_k)))
    std_v = float(np.sqrt(2.0 / (d_model + d_v)))
    std_fc = float(np.sqrt(2.0 / (n_head * d_v + d_model)))  # xavier_normal_
    wq = jax.random.normal(ks[0], (d_model, n_head * d_k), jnp.float32) * std_qk
    wk = jax.random.normal(ks[1], (d_model, n_head * d_k), jnp.float32) * std_qk
    wv = jax.random.normal(ks[2], (d_model, n_head * d_v), jnp.float32) * std_v
    wfc = jax.random.normal(ks[3], (n_head * d_v, d_model), jnp.float32) * std_fc
    bq = jnp.zeros((1, n_head * d_k), jnp.float32)
    bk = jnp.zeros((1, n_head * d_k), jnp.float32)
    bv = jnp.zeros((1, n_head * d_v), jnp.float32)
    return dict(
        # bf16 weight storage (MXU-native, halves weight HBM/VMEM traffic)
        wq=wq.astype(jnp.bfloat16), wk=wk.astype(jnp.bfloat16), wv=wv.astype(jnp.bfloat16),
        wfc=wfc.astype(jnp.bfloat16),
        bq=bq, bk=bk, bv=bv,
        bfc=jnp.zeros((1, d_model), jnp.float32),
        ln_gamma=jnp.ones((1, d_model), jnp.float32),
        ln_beta=jnp.zeros((1, d_model), jnp.float32),
        # one-time fused-QKV prep, hoisted out of the forward pass (self-attention fast path)
        w_qkv=jnp.concatenate([wq, wk, wv], axis=1).astype(jnp.bfloat16),
        b_qkv=jnp.concatenate([bq, bk, bv], axis=1),
    )


def sparse_multi_head_attention(params, q, k, v, *, n_head, d_k, d_v):
    # TODO(synk): masked_fill path (mask is not None) not implemented.
    sz_b, len_q, d_model = q.shape
    len_k, len_v = k.shape[1], v.shape[1]
    assert len_k == len_v
    n_q = n_head * d_k

    residual = q.reshape(sz_b * len_q, d_model)
    qf = q.reshape(sz_b * len_q, d_model)

    if (q is k) and (k is v):
        # Self-attention: one wide matmul against the pre-concatenated [Wq|Wk|Wv].
        proj = linear(qf, params["w_qkv"], params["b_qkv"])          # (M, 2*n_q + n_v)
        qp = proj[:, :n_q]
        kp = proj[:, n_q:2 * n_q]
        vp = proj[:, 2 * n_q:]
    else:
        kf = k.reshape(sz_b * len_k, d_model)
        vf = v.reshape(sz_b * len_v, d_model)
        qp = linear(qf, params["wq"], params["bq"])
        kp = linear(kf, params["wk"], params["bk"])
        vp = linear(vf, params["wv"], params["bv"])

    def split_heads(x2d, L, d):
        return jnp.transpose(x2d.reshape(sz_b, L, n_head, d), (2, 0, 1, 3)).reshape(
            n_head * sz_b, L, d)

    qh = split_heads(qp, len_q, d_k)
    kh = split_heads(kp, len_k, d_k)

    # Channel-major view of head-split origin_v: vt[c, h*sz_b+b, l] = origin_v[h*sz_b+b, l, c]
    vt = jnp.transpose(vp.reshape(sz_b, len_v, n_head, d_v), (3, 2, 0, 1)).reshape(
        d_v, n_head * sz_b, len_v)

    # SparseSemiWeight, factored: only the per-(slice, channel) score is needed.
    score_t = sparse_semi_score(vt)                                   # (d_v, n_bh)
    score = score_t.T.reshape(n_head * sz_b, 1, d_v)                  # tiny transpose

    temperature = float(np.power(d_k, 0.2))
    attn, ctx_t = attention(qh, kh, score, temperature)

    # merge heads: (n_bh, d_v, Lq) -> (sz_b*len_q, n_head*d_v)
    ctx = jnp.transpose(ctx_t.reshape(n_head, sz_b, d_v, len_q), (1, 3, 0, 2)).reshape(
        sz_b * len_q, n_head * d_v)

    out = fc_layernorm(ctx, params["wfc"], params["bfc"], residual,
                       params["ln_gamma"], params["ln_beta"])
    return out.reshape(sz_b, len_q, d_model), attn


if __name__ == "__main__":
    n_head, d_model, d_k, d_v = 2, 32, 16, 16
    sz_b, seq = 2, 8

    key = jax.random.PRNGKey(0)
    kp, kx, kk, kv = jax.random.split(key, 4)
    params = init_params(kp, n_head, d_model, d_k, d_v)

    # 1) self-attention: exercises the fused [Wq|Wk|Wv] projection path
    x = jax.random.normal(kx, (sz_b, seq, d_model), jnp.float32)
    out_sa, attn_sa = sparse_multi_head_attention(params, x, x, x,
                                                  n_head=n_head, d_k=d_k, d_v=d_v)

    # 2) distinct q/k/v: exercises the separate-projection path
    k = jax.random.normal(kk, (sz_b, seq, d_model), jnp.float32)
    v = jax.random.normal(kv, (sz_b, seq, d_model), jnp.float32)
    out_x, attn_x = sparse_multi_head_attention(params, x, k, v,
                                                n_head=n_head, d_k=d_k, d_v=d_v)

    jax.block_until_ready((out_sa, attn_sa, out_x, attn_x))

    for out, attn in ((out_sa, attn_sa), (out_x, attn_x)):
        assert out.shape == (sz_b, seq, d_model)
        assert attn.shape == (n_head * sz_b, seq, seq)
        assert bool(jnp.all(jnp.isfinite(out))) and bool(jnp.all(jnp.isfinite(attn)))
        assert bool(jnp.allclose(jnp.sum(attn, axis=-1), 1.0, atol=1e-2))
    print("KERNEL_OK")
</pallas_src>

<mosaic_0001>
module attributes {stable_mosaic.version = 11 : i64} {
  func.func @_linear_kernel(%arg0: i32, %arg1: i32, %arg2: memref<16x32xf32, #tpu.memory_space<vmem>>, %arg3: memref<32x96xbf16, #tpu.memory_space<vmem>>, %arg4: memref<1x96xf32, #tpu.memory_space<vmem>>, %arg5: memref<16x96xf32, #tpu.memory_space<vmem>>) attributes {dimension_semantics = [#tpu.dimension_semantics<parallel>, #tpu.dimension_semantics<parallel>], iteration_bounds = array<i64: 1, 1>, scalar_prefetch = 0 : i64, scratch_operands = 0 : i64, tpu.core_type = #tpu.core_type<tc>, window_params = [{transform_indices = @transform_0, window_bounds = array<i64: 16, 32>}, {transform_indices = @transform_1, window_bounds = array<i64: 32, 96>}, {transform_indices = @transform_2, window_bounds = array<i64: 1, 96>}, {transform_indices = @transform_3, window_bounds = array<i64: 16, 96>}]} {
    %c0 = arith.constant 0 : index
    %c0_0 = arith.constant 0 : index
    %0 = vector.load %arg2[%c0, %c0_0] : memref<16x32xf32, #tpu.memory_space<vmem>>, vector<16x32xf32>
    %1 = arith.truncf %0 : vector<16x32xf32> to vector<16x32xbf16>
    %c0_1 = arith.constant 0 : index
    %c0_2 = arith.constant 0 : index
    %2 = vector.load %arg3[%c0_1, %c0_2] : memref<32x96xbf16, #tpu.memory_space<vmem>>, vector<32x96xbf16>
    %cst = arith.constant dense<0.000000e+00> : vector<16x96xf32>
    %3 = tpu.matmul %1, %2, %cst {dimension_numbers = #tpu.dot_dimension_numbers<[1], [0], [0], [1], [0, 0, 1, 1], [], []>} : vector<16x32xbf16>, vector<32x96xbf16>, vector<16x96xf32> -> vector<16x96xf32>
    %c0_3 = arith.constant 0 : index
    %c0_4 = arith.constant 0 : index
    %4 = vector.load %arg4[%c0_3, %c0_4] : memref<1x96xf32, #tpu.memory_space<vmem>>, vector<1x96xf32>
    %5 = vector.broadcast %4 : vector<1x96xf32> to vector<16x96xf32>
    %6 = arith.addf %3, %5 : vector<16x96xf32>
    %c0_5 = arith.constant 0 : index
    %c0_6 = arith.constant 0 : index
    %7 = vector.load %arg5[%c0_5, %c0_6] : memref<16x96xf32, #tpu.memory_space<vmem>>, vector<16x96xf32>
    tpu.vector_store %arg5[%c0_5, %c0_6], %6 {strides = array<i32>} : memref<16x96xf32, #tpu.memory_space<vmem>>, vector<16x96xf32>,
    return
  }
  func.func @transform_0(%arg0: i32, %arg1: i32) -> (i32, i32) {
    %c0_i32 = arith.constant 0 : i32
    %c0_i32_0 = arith.constant 0 : i32
    return %arg0, %c0_i32 : i32, i32
  }
  func.func @transform_1(%arg0: i32, %arg1: i32) -> (i32, i32) {
    %c0_i32 = arith.constant 0 : i32
    %c0_i32_0 = arith.constant 0 : i32
    return %c0_i32, %arg1 : i32, i32
  }
  func.func @transform_2(%arg0: i32, %arg1: i32) -> (i32, i32) {
    %c0_i32 = arith.constant 0 : i32
    %c0_i32_0 = arith.constant 0 : i32
    return %c0_i32, %arg1 : i32, i32
  }
  func.func @transform_3(%arg0: i32, %arg1: i32) -> (i32, i32) {
    %c0_i32 = arith.constant 0 : i32
    return %arg0, %arg1 : i32, i32
  }
}

</mosaic_0001>

<llo_original>
// kernel: tpu_custom_call.1
$region0: #{tpu_custom_call.1}
  #allocation0 [shape = 'u32[]', space=smem, size = 0x4, offset = 0x4, fixed_abs, tag = 'smem constant byte address 0x4 - core index']
  #allocation1 [shape = 'u32[144,128]{1,0:T(1,128)}', space=vmem, size = 0x12000, scoped, tag = 'internal scratch']
  %s0 = inlined_call_operand.hbm [shape: f32[16,32], index: 0, kind: input, shape index: {}]
  %s1 = inlined_call_operand.hbm [shape: bf16[32,96], index: 1, kind: input, shape index: {}]
  %s2 = inlined_call_operand.hbm [shape: f32[1,96], index: 2, kind: input, shape index: {}]
  %s3 = inlined_call_operand.hbm [shape: f32[16,96], index: 3, kind: output, shape index: {}]
  %s4 = sld [smem:[#allocation0]]
  $region34: #{tpu_custom_call.1} parent=0
    _
  %s6 = ssub.s32 1, %s4
  %s7 = scalar_select 0, %s6, %s4
  $region1: #{tpu_custom_call.1} parent=0
    #allocation2 [shape = 'u8[8192]{0}', space=vmem, size = 0x2000, scoped, tag = 'input window, operand 0, single buffered']
    #allocation3 [shape = 's32[1]{0}', space=sflag, size = 0x4, scoped, tag = 'scoped memory for tpu_custom_call.1']
    #allocation4 [shape = 's32[1]{0}', space=sflag, size = 0x4, scoped, tag = 'scoped memory for tpu_custom_call.1']
    #allocation5 [shape = 'u8[8192]{0}', space=vmem, size = 0x2000, scoped, tag = 'input window, operand 1, single buffered']
    #allocation6 [shape = 's32[1]{0}', space=sflag, size = 0x4, scoped, tag = 'scoped memory for tpu_custom_call.1']
    #allocation7 [shape = 'u8[512]{0}', space=vmem, size = 0x400, scoped, tag = 'input window, operand 2, single buffered']
    #allocation8 [shape = 'u8[8192]{0}', space=vmem, size = 0x2000, scoped, tag = 'output window, operand 0, single buffered']
    %8 = vsyncpa [#allocation3], 0
    %9 = vsyncpa [#allocation6], 0
    %10 = vsyncpa [#allocation4], 0
    // Predicated region
    $region2: #{tpu_custom_call.1} parent=1 // pred_check
      _
    $region3: #{tpu_custom_call.1} parent=1 // pred_check_branch
      %12 = sbr.rel (0) target = $region5
    $region4: #{tpu_custom_call.1} parent=1 // pred_region
      %s14 = ssub.s32 256, 256
      %15 = vsyncadd [#allocation3], %s14
      %s16 = sshll.u32 [#allocation2], 4
      %s17 = int_to_ptr.vmem [resolvable:$true] %s16
      %22 = dma.hbm_to_vmem [thread:$0]  %s0, 256, %s17, [#allocation3], 128, 128, 8
    $region5: #{tpu_custom_call.1} parent=1 // pred_fallthru
      _
    // Predicated region
    $region6: #{tpu_custom_call.1} parent=1 // pred_check
      _
    $region7: #{tpu_custom_call.1} parent=1 // pred_check_branch
      %24 = sbr.rel (0) target = $region9
    $region8: #{tpu_custom_call.1} parent=1 // pred_region
      %s26 = ssub.s32 256, 256
      %27 = vsyncadd [#allocation6], %s26
      %s28 = sshll.u32 [#allocation5], 4
      %s29 = int_to_ptr.vmem [resolvable:$true] %s28
      %34 = dma.hbm_to_vmem [thread:$0]  %s1, 256, %s29, [#allocation6], 64, 64, 4
    $region9: #{tpu_custom_call.1} parent=1 // pred_fallthru
      _
    // Predicated region
    $region10: #{tpu_custom_call.1} parent=1 // pred_check
      _
    $region11: #{tpu_custom_call.1} parent=1 // pred_check_branch
      %36 = sbr.rel (0) target = $region13
    $region12: #{tpu_custom_call.1} parent=1 // pred_region
      %s38 = ssub.s32 16, 16
      %39 = vsyncadd [#allocation6], %s38
      %s41 = sshll.u32 [#allocation7], 4
      %s42 = int_to_ptr.vmem [resolvable:$true] %s41
      %44 = dma.hbm_to_vmem [thread:$0]  %s2, 16, %s42, [#allocation6]
    $region13: #{tpu_custom_call.1} parent=1 // pred_fallthru
      _
    // Predicated region
    $region14: #{tpu_custom_call.1} parent=1 // pred_check
      _
    $region15: #{tpu_custom_call.1} parent=1 // pred_check_branch
      %46 = sbr.rel (0) target = $region17
    $region16: #{tpu_custom_call.1} parent=1 // pred_region
      %47 = dma.done [#allocation3], 256
    $region17: #{tpu_custom_call.1} parent=1 // pred_fallthru
      _
    // Predicated region
    $region18: #{tpu_custom_call.1} parent=1 // pred_check
      _
    $region19: #{tpu_custom_call.1} parent=1 // pred_check_branch
      %49 = sbr.rel (0) target = $region21
    $region20: #{tpu_custom_call.1} parent=1 // pred_region
      %50 = dma.done [#allocation6], 256
    $region21: #{tpu_custom_call.1} parent=1 // pred_fallthru
      _
    // Predicated region
    $region22: #{tpu_custom_call.1} parent=1 // pred_check
      _
    $region23: #{tpu_custom_call.1} parent=1 // pred_check_branch
      %52 = sbr.rel (0) target = $region25
    $region24: #{tpu_custom_call.1} parent=1 // pred_region
      %53 = dma.done [#allocation6], 16
    $region25: #{tpu_custom_call.1} parent=1 // pred_fallthru
      _
    %v55 = vld [vmem:[#allocation2] sm:$0xff]
    %v56 = vld [vmem:[#allocation2 + $0x8] sm:$0xff]
    %v57 = vpack.c.bf16 %v56, %v55
    %v58 = vld [vmem:[#allocation5] sm:$0xf]
    %v59 = vld [vmem:[#allocation5 + $0x4] sm:$0xf]
    %v60 = vld [vmem:[#allocation5 + $0x8] sm:$0xf]
    %v61 = vld [vmem:[#allocation5 + $0xc] sm:$0xf]
    %v62 = vld [vmem:[#allocation7] sm:$0x1]
    %v64 = vlaneseq
    %v65 = vshrl.u32 %v64, 7
    %v66 = vsub.s32 0, %v65
    %v67 = vrot.slane %v62, %v66
    %v73 = vunpack.c.l.b16 %v58
    %v74 = vunpack.c.l.b16 %v59
    %v75 = vunpack.c.l.b16 %v60
    %v76 = vunpack.c.l.b16 %v61
    %v77 = vpack.c.b16 %v74, %v73
    %v78 = vpack.c.b16 %v76, %v75
    %vm81 = vcmask 261120
    %v83 = vsel %vm81, %v57, 0
    %85 = vmatprep.subr.bf16.mxu0 0
    %86 = vmatpush1.bf16.msra.mxu0 %v77
    %87 = vmatprep.subr.bf16.mxu0 0
    %88 = vmatpush1.bf16.msra.mxu0 %v78
    %89 = vmatprep.subr.bf16.mxu0 0
    %90 = vmatpush1.bf16.msra.mxu0 0
    %91 = vmatprep.subr.bf16.mxu0 0
    %92 = vmatpush1.bf16.msra.mxu0 0
    %93 = vmatprep.subr.bf16.mxu0 0
    %94 = vmatpush1.bf16.msra.mxu0 0
    %95 = vmatprep.subr.bf16.mxu0 0
    %96 = vmatpush1.bf16.msra.mxu0 0
    %97 = vmatprep.subr.bf16.mxu0 0
    %98 = vmatpush1.bf16.msra.mxu0 0
    %99 = vmatprep.subr.bf16.mxu0 0
    %100 = vmatpush1.bf16.msra.mxu0 0
    %101 = vmatprep.subr.bf16.mxu0 0
    %102 = vmatpush1.bf16.msra.mxu0 0
    %103 = vmatprep.subr.bf16.mxu0 0
    %104 = vmatpush1.bf16.msra.mxu0 0
    %105 = vmatprep.subr.bf16.mxu0 0
    %106 = vmatpush1.bf16.msra.mxu0 0
    %107 = vmatprep.subr.bf16.mxu0 0
    %108 = vmatpush1.bf16.msra.mxu0 0
    %109 = vmatprep.subr.bf16.mxu0 0
    %110 = vmatpush1.bf16.msra.mxu0 0
    %111 = vmatprep.subr.bf16.mxu0 0
    %112 = vmatpush1.bf16.msra.mxu0 0
    %113 = vmatprep.subr.bf16.mxu0 0
    %114 = vmatpush1.bf16.msra.mxu0 0
    %115 = vmatprep.subr.bf16.mxu0 0
    %116 = vmatpush1.bf16.msra.mxu0 0
    %117 = vmatprep.mubr.bf16.mxu0 0
    %118 = vmatmul.mubr.bf16.gmra.mrb[0].mxu0 %v83
    %v119 = vpop.f32.mrb[0].mxu0
    %v120 = vadd.f32 %v67, %v119
    %v121 = vpop.f32.mrb[0].mxu0
    %v122 = vpop.f32.mrb[0].mxu0
    %v123 = vadd.f32 %v67, %v122
    %v124 = vpop.f32.mrb[0].mxu0
    %125 = vdwg.mxu0
    %vm126 = vcmask 785408
    %127 = vst.msk [vmem:[#allocation8] sm:$0xff] %vm126, %v120
    %128 = vst.msk [vmem:[#allocation8 + $0x8] sm:$0xff] %vm126, %v123
    // Predicated region
    $region26: #{tpu_custom_call.1} parent=1 // pred_check
      _
    $region27: #{tpu_custom_call.1} parent=1 // pred_check_branch
      %130 = sbr.rel (0) target = $region29
    $region28: #{tpu_custom_call.1} parent=1 // pred_region
      %s132 = ssub.s32 256, 256
      %133 = vsyncadd [#allocation4], %s132
      %s134 = sshll.u32 [#allocation8], 4
      %s135 = int_to_ptr.vmem [resolvable:$true] %s134
      %140 = dma.vmem_to_hbm [thread:$0]  %s135, 256, %s3, [#allocation4], 128, 128, 8
    $region29: #{tpu_custom_call.1} parent=1 // pred_fallthru
      _
    // Predicated region
    $region30: #{tpu_custom_call.1} parent=1 // pred_check
      _
    $region31: #{tpu_custom_call.1} parent=1 // pred_check_branch
      %142 = sbr.rel (0) target = $region33
    $region32: #{tpu_custom_call.1} parent=1 // pred_region
      %143 = dma.done [#allocation4], 256
    $region33: #{tpu_custom_call.1} parent=1 // pred_fallthru
      _
    %144 = vsyncpa [#allocation3], 1
    %145 = vsyncpa [#allocation6], 1
    %146 = vsyncpa [#allocation4], 1

</llo_original>
